<compile_context>
chip_gen: v7x
topology: tpu7x:2x2x1
jax: 0.10.0
libtpu: 0.0.40
codegen_flags: <defaults>
</compile_context>

<pallas_src>
import jax
import jax.numpy as jnp
from jax.experimental import pallas as pl
from jax.experimental.pallas import tpu as pltpu


def _round_up(x, m):
    return (x + m - 1) // m * m


def node_layer_kernel(x_ref, wd_ref, bd_ref, wl_ref, cvec_ref, exp_ref,
                      out_ref, d_acc):
    # Decisions depend only on the batch tile -> compute once per batch tile
    # (nj == 0) and cache in VMEM scratch across the N-tile axis.
    @pl.when(pl.program_id(1) == 0)
    def _():
        d_logits = jnp.dot(x_ref[...], wd_ref[...],
                           preferred_element_type=jnp.float32) + bd_ref[...]
        d_acc[...] = jax.nn.sigmoid(d_logits)                      # [tb, Tp] f32

    # Leaf branch for this N tile. BN scale is already folded into wl / bias.
    leaf = jnp.dot(x_ref[...], wl_ref[...],
                   preferred_element_type=jnp.float32) + cvec_ref[0:1, :]

    # Broadcast decisions over tree_dim via a 0/1 expansion matmul (lane-aligned,
    # exact column selection; avoids in-kernel reshapes of a tree_dim-minor axis).
    gate = jnp.dot(d_acc[...].astype(exp_ref.dtype), exp_ref[...],
                   preferred_element_type=jnp.float32)             # [tb, tn]

    # Gating + folded BatchNorm (eval): out = leaf_scaled * gate + shift.
    out_ref[...] = (leaf * gate + cvec_ref[1:2, :]).astype(out_ref.dtype)


def node_layer_forward(x, params, *, num_trees, tree_dim, eps=1e-5,
                       compute_dtype=jnp.bfloat16, tb=256, tn_cap=512,
                       out_dtype=jnp.float32):
    """x: [B, hidden_dim]. Returns [B, num_trees * tree_dim] (eval-mode forward)."""
    wd, bd, wl, bl, gamma, beta, rmean, rvar = params
    B, H = x.shape
    T = num_trees
    N = num_trees * tree_dim

    # ---- Fold eval-mode BatchNorm into scale/shift; fold scale into leaf weights.
    scale = gamma * jax.lax.rsqrt(rvar + eps)                      # [1, N]
    shift = beta - rmean * scale                                   # [1, N]
    wl_s = wl * scale                                              # [H, N]
    bl_s = bl * scale                                              # [1, N]

    # ---- Lane/sublane friendly padded sizes and tiles.
    Tp = _round_up(T, 128)                                         # decision lanes
    Np = _round_up(N, 128)                                         # output lanes
    tn = Np if Np <= tn_cap else tn_cap                            # N tile (x128)
    Np = _round_up(Np, tn)
    tb = min(tb, _round_up(B, 8))                                  # batch tile
    Bp = _round_up(B, tb)

    x_p = jnp.zeros((Bp, H), x.dtype).at[:B].set(x).astype(compute_dtype)
    wd_p = jnp.zeros((H, Tp), wd.dtype).at[:, :T].set(wd).astype(compute_dtype)
    bd_p = jnp.zeros((1, Tp), jnp.float32).at[:, :T].set(bd.astype(jnp.float32))
    wl_p = jnp.zeros((H, Np), wl.dtype).at[:, :N].set(wl_s).astype(compute_dtype)
    # Per-output-column vectors merged into one [2, Np] array: row0 = bl*scale, row1 = shift.
    cvec = (jnp.zeros((2, Np), jnp.float32)
            .at[0, :N].set(bl_s[0].astype(jnp.float32))
            .at[1, :N].set(shift[0].astype(jnp.float32)))
    # 0/1 expansion matrix: output column j is gated by decision j // tree_dim.
    cols = jnp.arange(Np)
    expand = ((jnp.arange(Tp)[:, None] == (cols // tree_dim)[None, :])
              & (cols[None, :] < N)).astype(compute_dtype)         # [Tp, Np]

    grid = (Bp // tb, Np // tn)

    out = pl.pallas_call(
        node_layer_kernel,
        out_shape=jax.ShapeDtypeStruct((Bp, Np), out_dtype),
        grid=grid,
        in_specs=[
            pl.BlockSpec((tb, H), lambda bi, nj: (bi, 0)),         # x batch tile
            pl.BlockSpec((H, Tp), lambda bi, nj: (0, 0)),          # decision W (resident)
            pl.BlockSpec((1, Tp), lambda bi, nj: (0, 0)),          # decision b
            pl.BlockSpec((H, tn), lambda bi, nj: (0, nj)),         # leaf W (BN-scaled), N tile
            pl.BlockSpec((2, tn), lambda bi, nj: (0, nj)),         # [bl*scale; shift]
            pl.BlockSpec((Tp, tn), lambda bi, nj: (0, nj)),        # expansion matrix tile
        ],
        out_specs=pl.BlockSpec((tb, tn), lambda bi, nj: (bi, nj)),
        scratch_shapes=[pltpu.VMEM((tb, Tp), jnp.float32)],        # cached decisions
        compiler_params=pltpu.CompilerParams(
            dimension_semantics=("parallel", "arbitrary"),
            vmem_limit_bytes=48 * 1024 * 1024),
    )(x_p, wd_p, bd_p, wl_p, cvec, expand)

    return out[:B, :N]


def init_params(key, hidden_dim, num_trees, tree_dim):
    """Deterministic, PyTorch-Linear-style uniform init (synthetic weights)."""
    N = num_trees * tree_dim
    k = jax.random.split(key, 6)
    bound = 1.0 / jnp.sqrt(hidden_dim)
    wd = jax.random.uniform(k[0], (hidden_dim, num_trees), jnp.float32, -bound, bound)
    bd = jax.random.uniform(k[1], (1, num_trees), jnp.float32, -bound, bound)
    wl = jax.random.uniform(k[2], (hidden_dim, N), jnp.float32, -bound, bound)
    bl = jax.random.uniform(k[3], (1, N), jnp.float32, -bound, bound)
    gamma = jax.random.uniform(k[4], (1, N), jnp.float32, 0.5, 1.5)
    beta = jax.random.uniform(k[5], (1, N), jnp.float32, -0.5, 0.5)
    rmean = jnp.zeros((1, N), jnp.float32)
    rvar = jnp.ones((1, N), jnp.float32)
    return (wd, bd, wl, bl, gamma, beta, rmean, rvar)


def node_layer_reference(x, params, *, num_trees, tree_dim, eps=1e-5):
    """Plain-JAX reference matching the PyTorch forward (eval mode)."""
    wd, bd, wl, bl, gamma, beta, rmean, rvar = params
    B = x.shape[0]
    decisions = jax.nn.sigmoid(x @ wd + bd)                        # [B, num_trees]
    leaf = (x @ wl + bl).reshape(B, num_trees, tree_dim)
    out = (leaf * decisions[:, :, None]).reshape(B, num_trees * tree_dim)
    out = (out - rmean) / jnp.sqrt(rvar + eps) * gamma + beta
    return out


if __name__ == "__main__":
    # Small shapes implied by the module: hidden_dim = num_trees * tree_dim
    batch, num_trees, tree_dim = 8, 4, 8
    hidden_dim = num_trees * tree_dim                              # 32

    key = jax.random.PRNGKey(0)
    kx, kp = jax.random.split(key)
    x = jax.random.normal(kx, (batch, hidden_dim), jnp.float32)
    params = init_params(kp, hidden_dim, num_trees, tree_dim)

    ref = node_layer_reference(x, params, num_trees=num_trees, tree_dim=tree_dim)

    # Exactness check: f32 compute path.
    out_f32 = node_layer_forward(x, params, num_trees=num_trees, tree_dim=tree_dim,
                                 compute_dtype=jnp.float32)
    out_f32 = jax.block_until_ready(out_f32)
    assert out_f32.shape == (batch, num_trees * tree_dim)
    assert jnp.allclose(out_f32, ref, atol=1e-5, rtol=1e-5), "f32 mismatch vs reference"

    # Performance path: bf16 weights/activations on the MXU, f32 accumulation + f32 BN/bias.
    out_bf16 = node_layer_forward(x, params, num_trees=num_trees, tree_dim=tree_dim,
                                  compute_dtype=jnp.bfloat16)
    out_bf16 = jax.block_until_ready(out_bf16)
    assert out_bf16.shape == (batch, num_trees * tree_dim)
    assert jnp.allclose(out_bf16, ref, atol=3e-2, rtol=3e-2), "bf16 mismatch vs reference"

    print("KERNEL_OK")
</pallas_src>

<mosaic_0001>
module attributes {stable_mosaic.version = 11 : i64} {
  func.func @node_layer_kernel(%arg0: i32, %arg1: i32, %arg2: memref<8x32xf32, #tpu.memory_space<vmem>>, %arg3: memref<32x128xf32, #tpu.memory_space<vmem>>, %arg4: memref<1x128xf32, #tpu.memory_space<vmem>>, %arg5: memref<32x128xf32, #tpu.memory_space<vmem>>, %arg6: memref<2x128xf32, #tpu.memory_space<vmem>>, %arg7: memref<128x128xf32, #tpu.memory_space<vmem>>, %arg8: memref<8x128xf32, #tpu.memory_space<vmem>>, %arg9: memref<8x128xf32, #tpu.memory_space<vmem>>) attributes {dimension_semantics = [#tpu.dimension_semantics<parallel>, #tpu.dimension_semantics<arbitrary>], iteration_bounds = array<i64: 1, 1>, scalar_prefetch = 0 : i64, scratch_operands = 1 : i64, tpu.core_type = #tpu.core_type<tc>, window_params = [{transform_indices = @transform_0, window_bounds = array<i64: 8, 32>}, {pipeline_mode = #tpu.pipeline_mode<synchronous>, transform_indices = @transform_1, window_bounds = array<i64: 32, 128>}, {pipeline_mode = #tpu.pipeline_mode<synchronous>, transform_indices = @transform_2, window_bounds = array<i64: 1, 128>}, {transform_indices = @transform_3, window_bounds = array<i64: 32, 128>}, {transform_indices = @transform_4, window_bounds = array<i64: 2, 128>}, {transform_indices = @transform_5, window_bounds = array<i64: 128, 128>}, {transform_indices = @transform_6, window_bounds = array<i64: 8, 128>}]} {
    %c0_i32 = arith.constant 0 : i32
    %0 = arith.cmpi eq, %arg1, %c0_i32 : i32
    %1 = arith.extui %0 : i1 to i32
    %c0_i32_0 = arith.constant 0 : i32
    %2 = arith.cmpi ne, %1, %c0_i32_0 : i32
    scf.if %2 {
      %c0_14 = arith.constant 0 : index
      %c0_15 = arith.constant 0 : index
      %17 = vector.load %arg2[%c0_14, %c0_15] : memref<8x32xf32, #tpu.memory_space<vmem>>, vector<8x32xf32>
      %c0_16 = arith.constant 0 : index
      %c0_17 = arith.constant 0 : index
      %18 = vector.load %arg3[%c0_16, %c0_17] : memref<32x128xf32, #tpu.memory_space<vmem>>, vector<32x128xf32>
      %cst_18 = arith.constant dense<0.000000e+00> : vector<8x128xf32>
      %19 = tpu.matmul %17, %18, %cst_18 {dimension_numbers = #tpu.dot_dimension_numbers<[1], [0], [0], [1], [0, 0, 1, 1], [], []>} : vector<8x32xf32>, vector<32x128xf32>, vector<8x128xf32> -> vector<8x128xf32>
      %c0_19 = arith.constant 0 : index
      %c0_20 = arith.constant 0 : index
      %20 = vector.load %arg4[%c0_19, %c0_20] : memref<1x128xf32, #tpu.memory_space<vmem>>, vector<1x128xf32>
      %21 = vector.broadcast %20 : vector<1x128xf32> to vector<8x128xf32>
      %22 = arith.addf %19, %21 : vector<8x128xf32>
      %23 = arith.negf %22 : vector<8x128xf32>
      %24 = math.exp %23 : vector<8x128xf32>
      %cst_21 = arith.constant 1.000000e+00 : f32
      %25 = vector.broadcast %cst_21 : f32 to vector<8x128xf32>
      %26 = arith.addf %25, %24 : vector<8x128xf32>
      %27 = arith.divf %25, %26 : vector<8x128xf32>
      %c0_22 = arith.constant 0 : index
      %c0_23 = arith.constant 0 : index
      %28 = vector.load %arg9[%c0_22, %c0_23] : memref<8x128xf32, #tpu.memory_space<vmem>>, vector<8x128xf32>
      tpu.vector_store %arg9[%c0_22, %c0_23], %27 {strides = array<i32>} : memref<8x128xf32, #tpu.memory_space<vmem>>, vector<8x128xf32>,
    } else {
    }
    %c0 = arith.constant 0 : index
    %c0_1 = arith.constant 0 : index
    %3 = vector.load %arg2[%c0, %c0_1] : memref<8x32xf32, #tpu.memory_space<vmem>>, vector<8x32xf32>
    %c0_2 = arith.constant 0 : index
    %c0_3 = arith.constant 0 : index
    %4 = vector.load %arg5[%c0_2, %c0_3] : memref<32x128xf32, #tpu.memory_space<vmem>>, vector<32x128xf32>
    %cst = arith.constant dense<0.000000e+00> : vector<8x128xf32>
    %5 = tpu.matmul %3, %4, %cst {dimension_numbers = #tpu.dot_dimension_numbers<[1], [0], [0], [1], [0, 0, 1, 1], [], []>} : vector<8x32xf32>, vector<32x128xf32>, vector<8x128xf32> -> vector<8x128xf32>
    %c0_4 = arith.constant 0 : index
    %c0_5 = arith.constant 0 : index
    %6 = vector.load %arg6[%c0_4, %c0_5] : memref<2x128xf32, #tpu.memory_space<vmem>>, vector<1x128xf32>
    %7 = vector.broadcast %6 : vector<1x128xf32> to vector<8x128xf32>
    %8 = arith.addf %5, %7 : vector<8x128xf32>
    %c0_6 = arith.constant 0 : index
    %c0_7 = arith.constant 0 : index
    %9 = vector.load %arg9[%c0_6, %c0_7] : memref<8x128xf32, #tpu.memory_space<vmem>>, vector<8x128xf32>
    %c0_8 = arith.constant 0 : index
    %c0_9 = arith.constant 0 : index
    %10 = vector.load %arg7[%c0_8, %c0_9] : memref<128x128xf32, #tpu.memory_space<vmem>>, vector<128x128xf32>
    %cst_10 = arith.constant dense<0.000000e+00> : vector<8x128xf32>
    %11 = tpu.matmul %9, %10, %cst_10 {dimension_numbers = #tpu.dot_dimension_numbers<[1], [0], [0], [1], [0, 0, 1, 1], [], []>} : vector<8x128xf32>, vector<128x128xf32>, vector<8x128xf32> -> vector<8x128xf32>
    %12 = arith.mulf %8, %11 : vector<8x128xf32>
    %c1 = arith.constant 1 : index
    %c0_11 = arith.constant 0 : index
    %13 = vector.load %arg6[%c1, %c0_11] : memref<2x128xf32, #tpu.memory_space<vmem>>, vector<1x128xf32>
    %14 = vector.broadcast %13 : vector<1x128xf32> to vector<8x128xf32>
    %15 = arith.addf %12, %14 : vector<8x128xf32>
    %c0_12 = arith.constant 0 : index
    %c0_13 = arith.constant 0 : index
    %16 = vector.load %arg8[%c0_12, %c0_13] : memref<8x128xf32, #tpu.memory_space<vmem>>, vector<8x128xf32>
    tpu.vector_store %arg8[%c0_12, %c0_13], %15 {strides = array<i32>} : memref<8x128xf32, #tpu.memory_space<vmem>>, vector<8x128xf32>,
    return
  }
  func.func @transform_0(%arg0: i32, %arg1: i32) -> (i32, i32) {
    %c0_i32 = arith.constant 0 : i32
    %c0_i32_0 = arith.constant 0 : i32
    return %arg0, %c0_i32 : i32, i32
  }
  func.func @transform_1(%arg0: i32, %arg1: i32) -> (i32, i32) {
    %c0_i32 = arith.constant 0 : i32
    %c0_i32_0 = arith.constant 0 : i32
    %c0_i32_1 = arith.constant 0 : i32
    return %c0_i32, %c0_i32_0 : i32, i32
  }
  func.func @transform_2(%arg0: i32, %arg1: i32) -> (i32, i32) {
    %c0_i32 = arith.constant 0 : i32
    %c0_i32_0 = arith.constant 0 : i32
    %c0_i32_1 = arith.constant 0 : i32
    return %c0_i32, %c0_i32_0 : i32, i32
  }
  func.func @transform_3(%arg0: i32, %arg1: i32) -> (i32, i32) {
    %c0_i32 = arith.constant 0 : i32
    %c0_i32_0 = arith.constant 0 : i32
    return %c0_i32, %arg1 : i32, i32
  }
  func.func @transform_4(%arg0: i32, %arg1: i32) -> (i32, i32) {
    %c0_i32 = arith.constant 0 : i32
    %c0_i32_0 = arith.constant 0 : i32
    return %c0_i32, %arg1 : i32, i32
  }
  func.func @transform_5(%arg0: i32, %arg1: i32) -> (i32, i32) {
    %c0_i32 = arith.constant 0 : i32
    %c0_i32_0 = arith.constant 0 : i32
    return %c0_i32, %arg1 : i32, i32
  }
  func.func @transform_6(%arg0: i32, %arg1: i32) -> (i32, i32) {
    %c0_i32 = arith.constant 0 : i32
    return %arg0, %arg1 : i32, i32
  }
}

</mosaic_0001>

<llo_original>
// kernel: tpu_custom_call.1
$region0: #{tpu_custom_call.1}
  #allocation0 [shape = 'u32[]', space=smem, size = 0x4, offset = 0x4, fixed_abs, tag = 'smem constant byte address 0x4 - core index']
  #allocation1 [shape = 'u32[144,128]{1,0:T(1,128)}', space=vmem, size = 0x12000, scoped, tag = 'internal scratch']
  #allocation2 [shape = 'f32[8,128]{1,0:T(8,128)}', space=vmem, size = 0x1000, scoped, tag = 'scratch operand']
  %s0 = inlined_call_operand.hbm [shape: f32[8,32], index: 0, kind: input, shape index: {}]
  %s1 = inlined_call_operand.hbm [shape: f32[32,128], index: 1, kind: input, shape index: {}]
  %s2 = inlined_call_operand.vmem [shape: f32[1,128], index: 2, kind: input, shape index: {}]
  %s3 = inlined_call_operand.hbm [shape: f32[32,128], index: 3, kind: input, shape index: {}]
  %s4 = inlined_call_operand.vmem [shape: f32[2,128], index: 4, kind: input, shape index: {}]
  %s5 = inlined_call_operand.hbm [shape: f32[128,128], index: 5, kind: input, shape index: {}]
  %s6 = inlined_call_operand.hbm [shape: f32[8,128], index: 6, kind: output, shape index: {}]
  %s7 = sld [smem:[#allocation0]]
  $region54: #{tpu_custom_call.1} parent=0
    _
  %s9 = ssub.s32 1, %s7
  %s10 = scalar_select 0, %s9, %s7
  $region1: #{tpu_custom_call.1} parent=0
    #allocation3 [shape = 'u8[4096]{0}', space=vmem, size = 0x1000, scoped, tag = 'input window, operand 0, single buffered']
    #allocation4 [shape = 's32[1]{0}', space=sflag, size = 0x4, scoped, tag = 'scoped memory for tpu_custom_call.1']
    #allocation5 [shape = 's32[1]{0}', space=sflag, size = 0x4, scoped, tag = 'scoped memory for tpu_custom_call.1']
    #allocation6 [shape = 'u8[16384]{0}', space=vmem, size = 0x4000, scoped, tag = 'input window, operand 1, single buffered']
    #allocation7 [shape = 's32[1]{0}', space=sflag, size = 0x4, scoped, tag = 'scoped memory for tpu_custom_call.1']
    #allocation8 [shape = 'u8[16384]{0}', space=vmem, size = 0x4000, scoped, tag = 'input window, operand 3, single buffered']
    #allocation9 [shape = 'u8[65536]{0}', space=vmem, size = 0x10000, scoped, tag = 'input window, operand 5, single buffered']
    #allocation10 [shape = 's32[1]{0}', space=sflag, size = 0x4, scoped, tag = 'scoped memory for tpu_custom_call.1']
    #allocation11 [shape = 'u8[4096]{0}', space=vmem, size = 0x1000, scoped, tag = 'output window, operand 0, single buffered']
    %11 = vsyncpa [#allocation4], 0
    %12 = vsyncpa [#allocation7], 0
    %13 = vsyncpa [#allocation10], 0
    %14 = vsyncpa [#allocation5], 0
    // Predicated region
    $region2: #{tpu_custom_call.1} parent=1 // pred_check
      _
    $region3: #{tpu_custom_call.1} parent=1 // pred_check_branch
      %16 = sbr.rel (0) target = $region5
    $region4: #{tpu_custom_call.1} parent=1 // pred_region
      %s18 = ssub.s32 128, 128
      %19 = vsyncadd [#allocation4], %s18
      %s21 = sshll.u32 [#allocation3], 4
      %s22 = int_to_ptr.vmem [resolvable:$true] %s21
      %24 = dma.hbm_to_vmem [thread:$0]  %s0, 128, %s22, [#allocation4]
    $region5: #{tpu_custom_call.1} parent=1 // pred_fallthru
      _
    // Predicated region
    $region6: #{tpu_custom_call.1} parent=1 // pred_check
      _
    $region7: #{tpu_custom_call.1} parent=1 // pred_check_branch
      %26 = sbr.rel (0) target = $region9
    $region8: #{tpu_custom_call.1} parent=1 // pred_region
      %s28 = ssub.s32 512, 512
      %29 = vsyncadd [#allocation7], %s28
      %s30 = sshll.u32 [#allocation6], 4
      %s31 = int_to_ptr.vmem [resolvable:$true] %s30
      %36 = dma.hbm_to_vmem [thread:$0]  %s1, 512, %s31, [#allocation7], 128, 128, 8
    $region9: #{tpu_custom_call.1} parent=1 // pred_fallthru
      _
    // Predicated region
    $region10: #{tpu_custom_call.1} parent=1 // pred_check
      _
    $region11: #{tpu_custom_call.1} parent=1 // pred_check_branch
      %38 = sbr.rel (0) target = $region13
    $region12: #{tpu_custom_call.1} parent=1 // pred_region
      _
    $region13: #{tpu_custom_call.1} parent=1 // pred_fallthru
      _
    // Predicated region
    $region14: #{tpu_custom_call.1} parent=1 // pred_check
      _
    $region15: #{tpu_custom_call.1} parent=1 // pred_check_branch
      %40 = sbr.rel (0) target = $region17
    $region16: #{tpu_custom_call.1} parent=1 // pred_region
      %s42 = ssub.s32 512, 512
      %43 = vsyncadd [#allocation7], %s42
      %s44 = sshll.u32 [#allocation8], 4
      %s45 = int_to_ptr.vmem [resolvable:$true] %s44
      %50 = dma.hbm_to_vmem [thread:$0]  %s3, 512, %s45, [#allocation7], 128, 128, 8
    $region17: #{tpu_custom_call.1} parent=1 // pred_fallthru
      _
    // Predicated region
    $region18: #{tpu_custom_call.1} parent=1 // pred_check
      _
    $region19: #{tpu_custom_call.1} parent=1 // pred_check_branch
      %52 = sbr.rel (0) target = $region21
    $region20: #{tpu_custom_call.1} parent=1 // pred_region
      _
    $region21: #{tpu_custom_call.1} parent=1 // pred_fallthru
      _
    // Predicated region
    $region22: #{tpu_custom_call.1} parent=1 // pred_check
      _
    $region23: #{tpu_custom_call.1} parent=1 // pred_check_branch
      %54 = sbr.rel (0) target = $region25
    $region24: #{tpu_custom_call.1} parent=1 // pred_region
      %s56 = ssub.s32 2048, 2048
      %57 = vsyncadd [#allocation10], %s56
      %s58 = sshll.u32 [#allocation9], 4
      %s59 = int_to_ptr.vmem [resolvable:$true] %s58
      %64 = dma.hbm_to_vmem [thread:$0]  %s5, 2048, %s59, [#allocation10], 128, 128, 8
    $region25: #{tpu_custom_call.1} parent=1 // pred_fallthru
      _
    // Predicated region
    $region26: #{tpu_custom_call.1} parent=1 // pred_check
      _
    $region27: #{tpu_custom_call.1} parent=1 // pred_check_branch
      %66 = sbr.rel (0) target = $region29
    $region28: #{tpu_custom_call.1} parent=1 // pred_region
      %67 = dma.done [#allocation4], 128
    $region29: #{tpu_custom_call.1} parent=1 // pred_fallthru
      _
    // Predicated region
    $region30: #{tpu_custom_call.1} parent=1 // pred_check
      _
    $region31: #{tpu_custom_call.1} parent=1 // pred_check_branch
      %69 = sbr.rel (0) target = $region33
    $region32: #{tpu_custom_call.1} parent=1 // pred_region
      %70 = dma.done [#allocation7], 512
    $region33: #{tpu_custom_call.1} parent=1 // pred_fallthru
      _
    // Predicated region
    $region34: #{tpu_custom_call.1} parent=1 // pred_check
      _
    $region35: #{tpu_custom_call.1} parent=1 // pred_check_branch
      %72 = sbr.rel (0) target = $region37
    $region36: #{tpu_custom_call.1} parent=1 // pred_region
      %73 = dma.done [#allocation7], 512
    $region37: #{tpu_custom_call.1} parent=1 // pred_fallthru
      _
    // Predicated region
    $region38: #{tpu_custom_call.1} parent=1 // pred_check
      _
    $region39: #{tpu_custom_call.1} parent=1 // pred_check_branch
      %75 = sbr.rel (0) target = $region41
    $region40: #{tpu_custom_call.1} parent=1 // pred_region
      %76 = dma.done [#allocation10], 2048
    $region41: #{tpu_custom_call.1} parent=1 // pred_fallthru
      _
    %p77 = scmp.eq.s32.totalorder 0, 0
    // Predicated region
    $region42: #{tpu_custom_call.1} parent=1 // pred_check
      %p78 = pneg %p77
    $region43: #{tpu_custom_call.1} parent=1 // pred_check_branch
      %80 = sbr.rel (%p78) target = $region45
    $region44: #{tpu_custom_call.1} parent=1 // pred_region
      %v81 = vld [vmem:[#allocation3] sm:$0xff]
      %v82 = vld [vmem:[#allocation6] sm:$0xff]
      %v83 = vld [vmem:[#allocation6 + $0x8] sm:$0xff]
      %v84 = vld [vmem:[#allocation6 + $0x10] sm:$0xff]
      %v85 = vld [vmem:[#allocation6 + $0x18] sm:$0xff]
      %v86 = vld [vmem:[%s2] sm:$0x1]
      %v88 = vlaneseq
      %v89 = vshrl.u32 %v88, 7
      %v90 = vsub.s32 0, %v89
      %v91 = vrot.slane %v86, %v90
      %vm93 = vcmask 261120
      %v95 = vsel %vm93, %v81, 0
      %97 = vmatprep.subr.mxu0 0.0
      %98 = vmatpush1.msra.mxu0 %v82
      %99 = vmatprep.subr.mxu0 0.0
      %100 = vmatpush1.msra.mxu0 %v83
      %101 = vmatprep.subr.mxu0 0.0
      %102 = vmatpush1.msra.mxu0 %v84
      %103 = vmatprep.subr.mxu0 0.0
      %104 = vmatpush1.msra.mxu0 %v85
      %105 = vmatprep.subr.mxu0 0.0
      %106 = vmatpush1.msra.mxu0 0.0
      %107 = vmatprep.subr.mxu0 0.0
      %108 = vmatpush1.msra.mxu0 0.0
      %109 = vmatprep.subr.mxu0 0.0
      %110 = vmatpush1.msra.mxu0 0.0
      %111 = vmatprep.subr.mxu0 0.0
      %112 = vmatpush1.msra.mxu0 0.0
      %113 = vmatprep.subr.mxu0 0.0
      %114 = vmatpush1.msra.mxu0 0.0
      %115 = vmatprep.subr.mxu0 0.0
      %116 = vmatpush1.msra.mxu0 0.0
      %117 = vmatprep.subr.mxu0 0.0
      %118 = vmatpush1.msra.mxu0 0.0
      %119 = vmatprep.subr.mxu0 0.0
      %120 = vmatpush1.msra.mxu0 0.0
      %121 = vmatprep.subr.mxu0 0.0
      %122 = vmatpush1.msra.mxu0 0.0
      %123 = vmatprep.subr.mxu0 0.0
      %124 = vmatpush1.msra.mxu0 0.0
      %125 = vmatprep.subr.mxu0 0.0
      %126 = vmatpush1.msra.mxu0 0.0
      %127 = vmatprep.subr.mxu0 0.0
      %128 = vmatpush1.msra.mxu0 0.0
      %129 = vmatprep.subr.mxu0 0.0
      %130 = vmatpush1.msra.mxu0 0.0
      %131 = vmatprep.subr.mxu0 0.0
      %132 = vmatpush1.msra.mxu0 0.0
      %133 = vmatprep.subr.mxu0 0.0
      %134 = vmatpush1.msra.mxu0 0.0
      %135 = vmatprep.subr.mxu0 0.0
      %136 = vmatpush1.msra.mxu0 0.0
      %137 = vmatprep.subr.mxu0 0.0
      %138 = vmatpush1.msra.mxu0 0.0
      %139 = vmatprep.subr.mxu0 0.0
      %140 = vmatpush1.msra.mxu0 0.0
      %141 = vmatprep.subr.mxu0 0.0
      %142 = vmatpush1.msra.mxu0 0.0
      %143 = vmatprep.subr.mxu0 0.0
      %144 = vmatpush1.msra.mxu0 0.0
      %145 = vmatprep.subr.mxu0 0.0
      %146 = vmatpush1.msra.mxu0 0.0
      %147 = vmatprep.subr.mxu0 0.0
      %148 = vmatpush1.msra.mxu0 0.0
      %149 = vmatprep.subr.mxu0 0.0
      %150 = vmatpush1.msra.mxu0 0.0
      %151 = vmatprep.subr.mxu0 0.0
      %152 = vmatpush1.msra.mxu0 0.0
      %153 = vmatprep.subr.mxu0 0.0
      %154 = vmatpush1.msra.mxu0 0.0
      %155 = vmatprep.subr.mxu0 0.0
      %156 = vmatpush1.msra.mxu0 0.0
      %157 = vmatprep.subr.mxu0 0.0
      %158 = vmatpush1.msra.mxu0 0.0
      %159 = vmatprep.subr.mxu0 0.0
      %160 = vmatpush1.msra.mxu0 0.0
      %161 = vmatprep.mubr.f32.mxu0 0.0
      %162 = vmatmul.mubr.f32.gmra.mrb[0].mxu0 %v95
      %v163 = vpop.f32.mrb[0].mxu0
      %v164 = vadd.f32 %v91, %v163
      %v165 = vpop.f32.mrb[0].mxu0
      %166 = vdwg.mxu0
      %v167 = vxor.u32 %v164, 2147483648
      %v168 = vmul.f32 %v167, 1.442695
      %v169 = vpow.pop %v168
      %v170 = vadd.f32 %v169, 1.0
      %v171 = vrcp.pop %v170
      %v172 = vmul.f32 1.0, %v171
      %173 = vst [vmem:[#allocation2] sm:$0xff] %v172
    $region45: #{tpu_custom_call.1} parent=1 // pred_fallthru
      _
    %v174 = vld [vmem:[#allocation3] sm:$0xff]
    %v175 = vld [vmem:[#allocation8] sm:$0xff]
    %v176 = vld [vmem:[#allocation8 + $0x8] sm:$0xff]
    %v177 = vld [vmem:[#allocation8 + $0x10] sm:$0xff]
    %v178 = vld [vmem:[#allocation8 + $0x18] sm:$0xff]
    %v179 = vld [vmem:[%s4] sm:$0x1]
    %v180 = vlaneseq
    %v181 = vshrl.u32 %v180, 7
    %v182 = vsub.s32 0, %v181
    %v183 = vrot.slane %v179, %v182
    %vm184 = vcmask 261120
    %v186 = vsel %vm184, %v174, 0
    %188 = vmatprep.subr.mxu0 0.0
    %189 = vmatpush1.msra.mxu0 %v175
    %190 = vmatprep.subr.mxu0 0.0
    %191 = vmatpush1.msra.mxu0 %v176
    %192 = vmatprep.subr.mxu0 0.0
    %193 = vmatpush1.msra.mxu0 %v177
    %194 = vmatprep.subr.mxu0 0.0
    %195 = vmatpush1.msra.mxu0 %v178
    %196 = vmatprep.subr.mxu0 0.0
    %197 = vmatpush1.msra.mxu0 0.0
    %198 = vmatprep.subr.mxu0 0.0
    %199 = vmatpush1.msra.mxu0 0.0
    %200 = vmatprep.subr.mxu0 0.0
    %201 = vmatpush1.msra.mxu0 0.0
    %202 = vmatprep.subr.mxu0 0.0
    %203 = vmatpush1.msra.mxu0 0.0
    %204 = vmatprep.subr.mxu0 0.0
    %205 = vmatpush1.msra.mxu0 0.0
    %206 = vmatprep.subr.mxu0 0.0
    %207 = vmatpush1.msra.mxu0 0.0
    %208 = vmatprep.subr.mxu0 0.0
    %209 = vmatpush1.msra.mxu0 0.0
    %210 = vmatprep.subr.mxu0 0.0
    %211 = vmatpush1.msra.mxu0 0.0
    %212 = vmatprep.subr.mxu0 0.0
    %213 = vmatpush1.msra.mxu0 0.0
    %214 = vmatprep.subr.mxu0 0.0
    %215 = vmatpush1.msra.mxu0 0.0
    %216 = vmatprep.subr.mxu0 0.0
    %217 = vmatpush1.msra.mxu0 0.0
    %218 = vmatprep.subr.mxu0 0.0
    %219 = vmatpush1.msra.mxu0 0.0
    %220 = vmatprep.subr.mxu0 0.0
    %221 = vmatpush1.msra.mxu0 0.0
    %222 = vmatprep.subr.mxu0 0.0
    %223 = vmatpush1.msra.mxu0 0.0
    %224 = vmatprep.subr.mxu0 0.0
    %225 = vmatpush1.msra.mxu0 0.0
    %226 = vmatprep.subr.mxu0 0.0
    %227 = vmatpush1.msra.mxu0 0.0
    %228 = vmatprep.subr.mxu0 0.0
    %229 = vmatpush1.msra.mxu0 0.0
    %230 = vmatprep.subr.mxu0 0.0
    %231 = vmatpush1.msra.mxu0 0.0
    %232 = vmatprep.subr.mxu0 0.0
    %233 = vmatpush1.msra.mxu0 0.0
    %234 = vmatprep.subr.mxu0 0.0
    %235 = vmatpush1.msra.mxu0 0.0
    %236 = vmatprep.subr.mxu0 0.0
    %237 = vmatpush1.msra.mxu0 0.0
    %238 = vmatprep.subr.mxu0 0.0
    %239 = vmatpush1.msra.mxu0 0.0
    %240 = vmatprep.subr.mxu0 0.0
    %241 = vmatpush1.msra.mxu0 0.0
    %242 = vmatprep.subr.mxu0 0.0
    %243 = vmatpush1.msra.mxu0 0.0
    %244 = vmatprep.subr.mxu0 0.0
    %245 = vmatpush1.msra.mxu0 0.0
    %246 = vmatprep.subr.mxu0 0.0
    %247 = vmatpush1.msra.mxu0 0.0
    %248 = vmatprep.subr.mxu0 0.0
    %249 = vmatpush1.msra.mxu0 0.0
    %250 = vmatprep.subr.mxu0 0.0
    %251 = vmatpush1.msra.mxu0 0.0
    %252 = vmatprep.mubr.f32.mxu0 0.0
    %253 = vmatmul.mubr.f32.gmra.mrb[0].mxu0 %v186
    %v254 = vpop.f32.mrb[0].mxu0
    %v255 = vadd.f32 %v183, %v254
    %v256 = vpop.f32.mrb[0].mxu0
    %257 = vdwg.mxu0
    %v258 = vld [vmem:[#allocation2] sm:$0xff]
    %v259 = vld [vmem:[#allocation9] sm:$0xff]
    %v260 = vld [vmem:[#allocation9 + $0x8] sm:$0xff]
    %v261 = vld [vmem:[#allocation9 + $0x10] sm:$0xff]
    %v262 = vld [vmem:[#allocation9 + $0x18] sm:$0xff]
    %v263 = vld [vmem:[#allocation9 + $0x20] sm:$0xff]
    %v264 = vld [vmem:[#allocation9 + $0x28] sm:$0xff]
    %v265 = vld [vmem:[#allocation9 + $0x30] sm:$0xff]
    %v266 = vld [vmem:[#allocation9 + $0x38] sm:$0xff]
    %v267 = vld [vmem:[#allocation9 + $0x40] sm:$0xff]
    %v268 = vld [vmem:[#allocation9 + $0x48] sm:$0xff]
    %v269 = vld [vmem:[#allocation9 + $0x50] sm:$0xff]
    %v270 = vld [vmem:[#allocation9 + $0x58] sm:$0xff]
    %v271 = vld [vmem:[#allocation9 + $0x60] sm:$0xff]
    %v272 = vld [vmem:[#allocation9 + $0x68] sm:$0xff]
    %v273 = vld [vmem:[#allocation9 + $0x70] sm:$0xff]
    %v274 = vld [vmem:[#allocation9 + $0x78] sm:$0xff]
    %275 = vmatprep.subr.mxu0 0.0
    %276 = vmatpush1.msra.mxu0 %v259
    %277 = vmatprep.subr.mxu0 0.0
    %278 = vmatpush1.msra.mxu0 %v260
    %279 = vmatprep.subr.mxu0 0.0
    %280 = vmatpush1.msra.mxu0 %v261
    %281 = vmatprep.subr.mxu0 0.0
    %282 = vmatpush1.msra.mxu0 %v262
    %283 = vmatprep.subr.mxu0 0.0
    %284 = vmatpush1.msra.mxu0 %v263
    %285 = vmatprep.subr.mxu0 0.0
    %286 = vmatpush1.msra.mxu0 %v264
    %287 = vmatprep.subr.mxu0 0.0
    %288 = vmatpush1.msra.mxu0 %v265
    %289 = vmatprep.subr.mxu0 0.0
    %290 = vmatpush1.msra.mxu0 %v266
    %291 = vmatprep.subr.mxu0 0.0
    %292 = vmatpush1.msra.mxu0 %v267
    %293 = vmatprep.subr.mxu0 0.0
    %294 = vmatpush1.msra.mxu0 %v268
    %295 = vmatprep.subr.mxu0 0.0
    %296 = vmatpush1.msra.mxu0 %v269
    %297 = vmatprep.subr.mxu0 0.0
    %298 = vmatpush1.msra.mxu0 %v270
    %299 = vmatprep.subr.mxu0 0.0
    %300 = vmatpush1.msra.mxu0 %v271
    %301 = vmatprep.subr.mxu0 0.0
    %302 = vmatpush1.msra.mxu0 %v272
    %303 = vmatprep.subr.mxu0 0.0
    %304 = vmatpush1.msra.mxu0 %v273
    %305 = vmatprep.subr.mxu0 0.0
    %306 = vmatpush1.msra.mxu0 %v274
    %307 = vmatprep.subr.mxu0 0.0
    %308 = vmatpush1.msra.mxu0 0.0
    %309 = vmatprep.subr.mxu0 0.0
    %310 = vmatpush1.msra.mxu0 0.0
    %311 = vmatprep.subr.mxu0 0.0
    %312 = vmatpush1.msra.mxu0 0.0
    %313 = vmatprep.subr.mxu0 0.0
    %314 = vmatpush1.msra.mxu0 0.0
    %315 = vmatprep.subr.mxu0 0.0
    %316 = vmatpush1.msra.mxu0 0.0
    %317 = vmatprep.subr.mxu0 0.0
    %318 = vmatpush1.msra.mxu0 0.0
    %319 = vmatprep.subr.mxu0 0.0
    %320 = vmatpush1.msra.mxu0 0.0
    %321 = vmatprep.subr.mxu0 0.0
    %322 = vmatpush1.msra.mxu0 0.0
    %323 = vmatprep.subr.mxu0 0.0
    %324 = vmatpush1.msra.mxu0 0.0
    %325 = vmatprep.subr.mxu0 0.0
    %326 = vmatpush1.msra.mxu0 0.0
    %327 = vmatprep.subr.mxu0 0.0
    %328 = vmatpush1.msra.mxu0 0.0
    %329 = vmatprep.subr.mxu0 0.0
    %330 = vmatpush1.msra.mxu0 0.0
    %331 = vmatprep.subr.mxu0 0.0
    %332 = vmatpush1.msra.mxu0 0.0
    %333 = vmatprep.subr.mxu0 0.0
    %334 = vmatpush1.msra.mxu0 0.0
    %335 = vmatprep.subr.mxu0 0.0
    %336 = vmatpush1.msra.mxu0 0.0
    %337 = vmatprep.subr.mxu0 0.0
    %338 = vmatpush1.msra.mxu0 0.0
    %339 = vmatprep.mubr.f32.mxu0 0.0
    %340 = vmatmul.mubr.f32.gmra.mrb[0].mxu0 %v258
    %v341 = vpop.f32.mrb[0].mxu0
    %v342 = vadd.f32 0.0, %v341
    %v343 = vpop.f32.mrb[0].mxu0
    %344 = vdwg.mxu0
    %v345 = vmul.f32 %v255, %v342
    %v346 = vld [vmem:[%s4 + $0x1] sm:$0x1]
    %v347 = vlaneseq
    %v348 = vshrl.u32 %v347, 7
    %v349 = vsub.s32 0, %v348
    %v350 = vrot.slane %v346, %v349
    %v351 = vadd.f32 %v345, %v350
    %352 = vst [vmem:[#allocation11] sm:$0xff] %v351
    // Predicated region
    $region46: #{tpu_custom_call.1} parent=1 // pred_check
      _
    $region47: #{tpu_custom_call.1} parent=1 // pred_check_branch
      %354 = sbr.rel (0) target = $region49
    $region48: #{tpu_custom_call.1} parent=1 // pred_region
      %s356 = ssub.s32 128, 128
      %357 = vsyncadd [#allocation5], %s356
      %s359 = sshll.u32 [#allocation11], 4
      %s360 = int_to_ptr.vmem [resolvable:$true] %s359
      %362 = dma.vmem_to_hbm [thread:$0]  %s360, 128, %s6, [#allocation5]
    $region49: #{tpu_custom_call.1} parent=1 // pred_fallthru
      _
    // Predicated region
    $region50: #{tpu_custom_call.1} parent=1 // pred_check
      _
    $region51: #{tpu_custom_call.1} parent=1 // pred_check_branch
      %364 = sbr.rel (0) target = $region53
    $region52: #{tpu_custom_call.1} parent=1 // pred_region
      %365 = dma.done [#allocation5], 128
    $region53: #{tpu_custom_call.1} parent=1 // pred_fallthru
      _
    %366 = vsyncpa [#allocation4], 1
    %367 = vsyncpa [#allocation7], 1
    %368 = vsyncpa [#allocation10], 1
    %369 = vsyncpa [#allocation5], 1

</llo_original>
